<compile_context>
chip_gen: v7x
topology: tpu7x:2x2x1
jax: 0.10.0
libtpu: 0.0.40
codegen_flags: <defaults>
</compile_context>

<pallas_src>
import functools

import jax
import jax.numpy as jnp
import numpy as np
from jax.experimental import pallas as pl
from jax.experimental.pallas import tpu as pltpu


def _round_up(x, m):
    return ((x + m - 1) // m) * m


def _aspp_matmul_kernel(patch_ref, w_ref, scale_ref, shift_ref, o_ref):
    # patch_ref: (TM, TK), w_ref: (TK, Cout_pad), o_ref: (TM, Cout_pad) f32
    k = pl.program_id(1)

    partial = jnp.dot(patch_ref[...], w_ref[...],
                      preferred_element_type=jnp.float32)

    @pl.when(k == 0)
    def _():
        o_ref[...] = partial          # output block doubles as the accumulator

    @pl.when(k > 0)
    def _():
        o_ref[...] += partial

    @pl.when(k == pl.num_programs(1) - 1)
    def _():
        # folded BatchNorm (eval) + ReLU epilogue, in place, f32
        y = o_ref[...] * scale_ref[...] + shift_ref[...]
        o_ref[...] = jnp.maximum(y, 0.0)


def aspp_module_forward(x_nchw, weight_oikk, gamma, beta, running_mean,
                        running_var, *, padding, dilation, eps=1e-5,
                        tm=512, tk=512, compute_dtype=jnp.float32):
    """Forward of _ASPPModule. x_nchw: (N, Cin, H, W) float32.

    compute_dtype=jnp.bfloat16 halves DMA/VMEM traffic on v6e/v7x (accumulation
    stays f32); default f32 keeps bit-tight agreement with the f32 reference.
    """
    N, Cin, H, W = x_nchw.shape
    Cout, _, KH, KW = weight_oikk.shape

    Ho = H + 2 * padding - dilation * (KH - 1)
    Wo = W + 2 * padding - dilation * (KW - 1)
    assert Ho > 0 and Wo > 0

    # ---- glue: im2col over dilated taps, taps folded into the K axis ----
    x_nhwc = jnp.transpose(x_nchw, (0, 2, 3, 1))                 # (N, H, W, Cin)
    x_pad = jnp.pad(x_nhwc, ((0, 0), (padding, padding),
                             (padding, padding), (0, 0)))
    cols = []
    for kh in range(KH):
        for kw in range(KW):
            cols.append(x_pad[:, kh * dilation: kh * dilation + Ho,
                              kw * dilation: kw * dilation + Wo, :])
    # (N, Ho, Wo, T, Cin) -> (M, T*Cin); K ordering = (kh, kw, cin)
    patches = jnp.stack(cols, axis=3).reshape(N * Ho * Wo, KH * KW * Cin)
    patches = patches.astype(compute_dtype)

    # weight (Cout, Cin, KH, KW) -> (KH, KW, Cin, Cout) -> (K, Cout); same order
    w_mat = jnp.transpose(weight_oikk, (2, 3, 1, 0)).reshape(KH * KW * Cin, Cout)
    w_mat = w_mat.astype(compute_dtype)

    # fold BN (eval mode) into per-channel scale/shift (f32)
    inv = 1.0 / jnp.sqrt(running_var.astype(jnp.float32) + eps)
    scale = gamma.astype(jnp.float32) * inv
    shift = beta.astype(jnp.float32) - running_mean.astype(jnp.float32) * scale

    M = N * Ho * Wo
    K = KH * KW * Cin

    # Lane/sublane-aligned, VMEM-sized tiles (biggest tile that fits wins).
    TM = min(tm, _round_up(M, 8))          # sublane multiple of 8
    M_pad = _round_up(M, TM)
    K_pad = _round_up(K, 128)              # lane multiple of 128
    TK = min(tk, K_pad)
    K_pad = _round_up(K_pad, TK)
    Cout_pad = _round_up(Cout, 128)        # lane-dense output (unmasked vst)

    patches_p = jnp.pad(patches, ((0, M_pad - M), (0, K_pad - K)))
    w_p = jnp.pad(w_mat, ((0, K_pad - K), (0, Cout_pad - Cout)))
    scale_p = jnp.pad(scale, (0, Cout_pad - Cout)).reshape(1, Cout_pad)
    shift_p = jnp.pad(shift, (0, Cout_pad - Cout)).reshape(1, Cout_pad)

    grid = (M_pad // TM, K_pad // TK)

    itemsize = jnp.dtype(compute_dtype).itemsize
    cost = pl.CostEstimate(
        flops=2 * M_pad * K_pad * Cout_pad,
        transcendentals=0,
        bytes_accessed=(M_pad * K_pad * itemsize                 # activations
                        + grid[0] * K_pad * Cout_pad * itemsize  # weights (per M tile)
                        + M_pad * Cout_pad * 4))                 # f32 output

    out_flat = pl.pallas_call(
        _aspp_matmul_kernel,
        out_shape=jax.ShapeDtypeStruct((M_pad, Cout_pad), jnp.float32),
        grid_spec=pltpu.PrefetchScalarGridSpec(
            num_scalar_prefetch=0,
            grid=grid,
            in_specs=[
                pl.BlockSpec((TM, TK), lambda m, k: (m, k)),
                pl.BlockSpec((TK, Cout_pad), lambda m, k: (k, 0)),
                pl.BlockSpec((1, Cout_pad), lambda m, k: (0, 0)),
                pl.BlockSpec((1, Cout_pad), lambda m, k: (0, 0)),
            ],
            out_specs=pl.BlockSpec((TM, Cout_pad), lambda m, k: (m, 0)),
        ),
        compiler_params=pltpu.CompilerParams(
            dimension_semantics=("parallel", "arbitrary"),
            vmem_limit_bytes=64 * 1024 * 1024),
        cost_estimate=cost,
    )(patches_p, w_p, scale_p, shift_p)

    # strip padding, back to NCHW
    out = out_flat[:M, :Cout].reshape(N, Ho, Wo, Cout)
    return jnp.transpose(out, (0, 3, 1, 2))


def _reference(x_nchw, weight_oikk, gamma, beta, running_mean, running_var,
               *, padding, dilation, eps=1e-5):
    y = jax.lax.conv_general_dilated(
        x_nchw, weight_oikk,
        window_strides=(1, 1),
        padding=[(padding, padding), (padding, padding)],
        rhs_dilation=(dilation, dilation),
        dimension_numbers=("NCHW", "OIHW", "NCHW"))
    inv = 1.0 / jnp.sqrt(running_var + eps)
    y = (y - running_mean[None, :, None, None]) * (gamma * inv)[None, :, None, None] \
        + beta[None, :, None, None]
    return jnp.maximum(y, 0.0)


if __name__ == "__main__":
    # _ASPPModule(in_planes=4, planes=8, kernel_size=3, padding=2, dilation=2)
    N, Cin, H, W = 2, 4, 16, 16
    Cout, Ksz, padding, dilation = 8, 3, 2, 2

    key = jax.random.PRNGKey(0)
    k_x, k_w, k_g, k_b, k_m, k_v = jax.random.split(key, 6)

    x = jax.random.normal(k_x, (N, Cin, H, W), dtype=jnp.float32)
    # kaiming-normal-ish deterministic init for the conv weight (no bias)
    weight = jax.random.normal(k_w, (Cout, Cin, Ksz, Ksz), dtype=jnp.float32) * (
        2.0 / (Cin * Ksz * Ksz)) ** 0.5
    gamma = 1.0 + 0.1 * jax.random.normal(k_g, (Cout,), dtype=jnp.float32)
    beta = 0.1 * jax.random.normal(k_b, (Cout,), dtype=jnp.float32)
    running_mean = 0.1 * jax.random.normal(k_m, (Cout,), dtype=jnp.float32)
    running_var = jnp.abs(jax.random.normal(k_v, (Cout,), dtype=jnp.float32)) + 0.5

    fwd = functools.partial(aspp_module_forward, padding=padding, dilation=dilation)
    out = jax.block_until_ready(
        fwd(x, weight, gamma, beta, running_mean, running_var))

    ref = _reference(x, weight, gamma, beta, running_mean, running_var,
                     padding=padding, dilation=dilation)
    np.testing.assert_allclose(np.asarray(out), np.asarray(ref),
                               rtol=1e-4, atol=1e-4)
    print("KERNEL_OK")
</pallas_src>

<mosaic_0001>
module attributes {stable_mosaic.version = 11 : i64} {
  func.func @_aspp_matmul_kernel(%arg0: i32, %arg1: i32, %arg2: memref<512x128xf32, #tpu.memory_space<vmem>>, %arg3: memref<128x128xf32, #tpu.memory_space<vmem>>, %arg4: memref<1x128xf32, #tpu.memory_space<vmem>>, %arg5: memref<1x128xf32, #tpu.memory_space<vmem>>, %arg6: memref<512x128xf32, #tpu.memory_space<vmem>>) attributes {dimension_semantics = [#tpu.dimension_semantics<parallel>, #tpu.dimension_semantics<arbitrary>], iteration_bounds = array<i64: 1, 1>, scalar_prefetch = 0 : i64, scratch_operands = 0 : i64, tpu.core_type = #tpu.core_type<tc>, window_params = [{transform_indices = @transform_0, window_bounds = array<i64: 512, 128>}, {transform_indices = @transform_1, window_bounds = array<i64: 128, 128>}, {pipeline_mode = #tpu.pipeline_mode<synchronous>, transform_indices = @transform_2, window_bounds = array<i64: 1, 128>}, {pipeline_mode = #tpu.pipeline_mode<synchronous>, transform_indices = @transform_3, window_bounds = array<i64: 1, 128>}, {transform_indices = @transform_4, window_bounds = array<i64: 512, 128>}]} {
    %c0 = arith.constant 0 : index
    %c0_0 = arith.constant 0 : index
    %0 = vector.load %arg2[%c0, %c0_0] : memref<512x128xf32, #tpu.memory_space<vmem>>, vector<512x128xf32>
    %c0_1 = arith.constant 0 : index
    %c0_2 = arith.constant 0 : index
    %1 = vector.load %arg3[%c0_1, %c0_2] : memref<128x128xf32, #tpu.memory_space<vmem>>, vector<128x128xf32>
    %cst = arith.constant dense<0.000000e+00> : vector<512x128xf32>
    %2 = tpu.matmul %0, %1, %cst {dimension_numbers = #tpu.dot_dimension_numbers<[1], [0], [0], [1], [0, 0, 1, 1], [], []>} : vector<512x128xf32>, vector<128x128xf32>, vector<512x128xf32> -> vector<512x128xf32>
    %c0_i32 = arith.constant 0 : i32
    %3 = arith.cmpi eq, %arg1, %c0_i32 : i32
    %4 = arith.extui %3 : i1 to i32
    %c0_i32_3 = arith.constant 0 : i32
    %5 = arith.cmpi ne, %4, %c0_i32_3 : i32
    scf.if %5 {
      %c0_8 = arith.constant 0 : index
      %c0_9 = arith.constant 0 : index
      %12 = vector.load %arg6[%c0_8, %c0_9] : memref<512x128xf32, #tpu.memory_space<vmem>>, vector<512x128xf32>
      tpu.vector_store %arg6[%c0_8, %c0_9], %2 {strides = array<i32>} : memref<512x128xf32, #tpu.memory_space<vmem>>, vector<512x128xf32>,
    } else {
    }
    %c0_i32_4 = arith.constant 0 : i32
    %6 = arith.cmpi sgt, %arg1, %c0_i32_4 : i32
    %7 = arith.extui %6 : i1 to i32
    %c0_i32_5 = arith.constant 0 : i32
    %8 = arith.cmpi ne, %7, %c0_i32_5 : i32
    scf.if %8 {
      %c0_8 = arith.constant 0 : index
      %c0_9 = arith.constant 0 : index
      %12 = vector.load %arg6[%c0_8, %c0_9] : memref<512x128xf32, #tpu.memory_space<vmem>>, vector<512x128xf32>
      %13 = arith.addf %12, %2 : vector<512x128xf32>
      %c0_10 = arith.constant 0 : index
      %c0_11 = arith.constant 0 : index
      %14 = vector.load %arg6[%c0_10, %c0_11] : memref<512x128xf32, #tpu.memory_space<vmem>>, vector<512x128xf32>
      tpu.vector_store %arg6[%c0_10, %c0_11], %13 {strides = array<i32>} : memref<512x128xf32, #tpu.memory_space<vmem>>, vector<512x128xf32>,
    } else {
    }
    %c0_i32_6 = arith.constant 0 : i32
    %9 = arith.cmpi eq, %arg1, %c0_i32_6 : i32
    %10 = arith.extui %9 : i1 to i32
    %c0_i32_7 = arith.constant 0 : i32
    %11 = arith.cmpi ne, %10, %c0_i32_7 : i32
    scf.if %11 {
      %c0_8 = arith.constant 0 : index
      %c0_9 = arith.constant 0 : index
      %12 = vector.load %arg6[%c0_8, %c0_9] : memref<512x128xf32, #tpu.memory_space<vmem>>, vector<512x128xf32>
      %c0_10 = arith.constant 0 : index
      %c0_11 = arith.constant 0 : index
      %13 = vector.load %arg4[%c0_10, %c0_11] : memref<1x128xf32, #tpu.memory_space<vmem>>, vector<1x128xf32>
      %14 = vector.broadcast %13 : vector<1x128xf32> to vector<512x128xf32>
      %15 = arith.mulf %12, %14 : vector<512x128xf32>
      %c0_12 = arith.constant 0 : index
      %c0_13 = arith.constant 0 : index
      %16 = vector.load %arg5[%c0_12, %c0_13] : memref<1x128xf32, #tpu.memory_space<vmem>>, vector<1x128xf32>
      %17 = vector.broadcast %16 : vector<1x128xf32> to vector<512x128xf32>
      %18 = arith.addf %15, %17 : vector<512x128xf32>
      %cst_14 = arith.constant 0.000000e+00 : f32
      %19 = vector.broadcast %cst_14 : f32 to vector<512x128xf32>
      %20 = arith.maximumf %18, %19 : vector<512x128xf32>
      %c0_15 = arith.constant 0 : index
      %c0_16 = arith.constant 0 : index
      %21 = vector.load %arg6[%c0_15, %c0_16] : memref<512x128xf32, #tpu.memory_space<vmem>>, vector<512x128xf32>
      tpu.vector_store %arg6[%c0_15, %c0_16], %20 {strides = array<i32>} : memref<512x128xf32, #tpu.memory_space<vmem>>, vector<512x128xf32>,
    } else {
    }
    return
  }
  func.func @transform_0(%arg0: i32, %arg1: i32) -> (i32, i32) {
    %c0_i32 = arith.constant 0 : i32
    return %arg0, %arg1 : i32, i32
  }
  func.func @transform_1(%arg0: i32, %arg1: i32) -> (i32, i32) {
    %c0_i32 = arith.constant 0 : i32
    %c0_i32_0 = arith.constant 0 : i32
    return %arg1, %c0_i32 : i32, i32
  }
  func.func @transform_2(%arg0: i32, %arg1: i32) -> (i32, i32) {
    %c0_i32 = arith.constant 0 : i32
    %c0_i32_0 = arith.constant 0 : i32
    %c0_i32_1 = arith.constant 0 : i32
    return %c0_i32, %c0_i32_0 : i32, i32
  }
  func.func @transform_3(%arg0: i32, %arg1: i32) -> (i32, i32) {
    %c0_i32 = arith.constant 0 : i32
    %c0_i32_0 = arith.constant 0 : i32
    %c0_i32_1 = arith.constant 0 : i32
    return %c0_i32, %c0_i32_0 : i32, i32
  }
  func.func @transform_4(%arg0: i32, %arg1: i32) -> (i32, i32) {
    %c0_i32 = arith.constant 0 : i32
    %c0_i32_0 = arith.constant 0 : i32
    return %arg0, %c0_i32 : i32, i32
  }
}

</mosaic_0001>

<llo_original>
// kernel: tpu_custom_call.1
$region0: #{tpu_custom_call.1}
  #allocation0 [shape = 'u32[]', space=smem, size = 0x4, offset = 0x4, fixed_abs, tag = 'smem constant byte address 0x4 - core index']
  #allocation1 [shape = 'u32[144,128]{1,0:T(1,128)}', space=vmem, size = 0x12000, scoped, tag = 'internal scratch']
  %s0 = inlined_call_operand.hbm [shape: f32[512,128], index: 0, kind: input, shape index: {}]
  %s1 = inlined_call_operand.hbm [shape: f32[128,128], index: 1, kind: input, shape index: {}]
  %s2 = inlined_call_operand.hbm [shape: f32[1,128], index: 2, kind: input, shape index: {}]
  %s3 = inlined_call_operand.hbm [shape: f32[1,128], index: 3, kind: input, shape index: {}]
  %s4 = inlined_call_operand.hbm [shape: f32[512,128], index: 4, kind: output, shape index: {}]
  %s5 = sld [smem:[#allocation0]]
  $region54: #{tpu_custom_call.1} parent=0
    _
  %s7 = ssub.s32 1, %s5
  %s8 = scalar_select 0, %s7, %s5
  $region1: #{tpu_custom_call.1} parent=0
    #allocation2 [shape = 'u8[262144]{0}', space=vmem, size = 0x40000, scoped, tag = 'input window, operand 0, single buffered']
    #allocation3 [shape = 's32[1]{0}', space=sflag, size = 0x4, scoped, tag = 'scoped memory for tpu_custom_call.1']
    #allocation4 [shape = 's32[1]{0}', space=sflag, size = 0x4, scoped, tag = 'scoped memory for tpu_custom_call.1']
    #allocation5 [shape = 'u8[65536]{0}', space=vmem, size = 0x10000, scoped, tag = 'input window, operand 1, single buffered']
    #allocation6 [shape = 's32[1]{0}', space=sflag, size = 0x4, scoped, tag = 'scoped memory for tpu_custom_call.1']
    #allocation7 [shape = 'u8[512]{0}', space=vmem, size = 0x400, scoped, tag = 'input window, operand 2, single buffered']
    #allocation8 [shape = 'u8[512]{0}', space=vmem, size = 0x400, scoped, tag = 'input window, operand 3, single buffered']
    #allocation9 [shape = 's32[1]{0}', space=sflag, size = 0x4, scoped, tag = 'scoped memory for tpu_custom_call.1']
    #allocation10 [shape = 'u8[262144]{0}', space=vmem, size = 0x40000, scoped, tag = 'output window, operand 0, single buffered']
    %9 = vsyncpa [#allocation3], 0
    %10 = vsyncpa [#allocation6], 0
    %11 = vsyncpa [#allocation9], 0
    %12 = vsyncpa [#allocation4], 0
    // Predicated region
    $region2: #{tpu_custom_call.1} parent=1 // pred_check
      _
    $region3: #{tpu_custom_call.1} parent=1 // pred_check_branch
      %14 = sbr.rel (0) target = $region5
    $region4: #{tpu_custom_call.1} parent=1 // pred_region
      %s16 = ssub.s32 8192, 8192
      %17 = vsyncadd [#allocation3], %s16
      %s18 = sshll.u32 [#allocation2], 4
      %s19 = int_to_ptr.vmem [resolvable:$true] %s18
      %24 = dma.hbm_to_vmem [thread:$0]  %s0, 8192, %s19, [#allocation3], 128, 128, 8
    $region5: #{tpu_custom_call.1} parent=1 // pred_fallthru
      _
    // Predicated region
    $region6: #{tpu_custom_call.1} parent=1 // pred_check
      _
    $region7: #{tpu_custom_call.1} parent=1 // pred_check_branch
      %26 = sbr.rel (0) target = $region9
    $region8: #{tpu_custom_call.1} parent=1 // pred_region
      %s28 = ssub.s32 2048, 2048
      %29 = vsyncadd [#allocation6], %s28
      %s30 = sshll.u32 [#allocation5], 4
      %s31 = int_to_ptr.vmem [resolvable:$true] %s30
      %36 = dma.hbm_to_vmem [thread:$0]  %s1, 2048, %s31, [#allocation6], 128, 128, 8
    $region9: #{tpu_custom_call.1} parent=1 // pred_fallthru
      _
    // Predicated region
    $region10: #{tpu_custom_call.1} parent=1 // pred_check
      _
    $region11: #{tpu_custom_call.1} parent=1 // pred_check_branch
      %38 = sbr.rel (0) target = $region13
    $region12: #{tpu_custom_call.1} parent=1 // pred_region
      %s40 = ssub.s32 16, 16
      %41 = vsyncadd [#allocation6], %s40
      %s43 = sshll.u32 [#allocation7], 4
      %s44 = int_to_ptr.vmem [resolvable:$true] %s43
      %46 = dma.hbm_to_vmem [thread:$0]  %s2, 16, %s44, [#allocation6]
    $region13: #{tpu_custom_call.1} parent=1 // pred_fallthru
      _
    // Predicated region
    $region14: #{tpu_custom_call.1} parent=1 // pred_check
      _
    $region15: #{tpu_custom_call.1} parent=1 // pred_check_branch
      %48 = sbr.rel (0) target = $region17
    $region16: #{tpu_custom_call.1} parent=1 // pred_region
      %s50 = ssub.s32 16, 16
      %51 = vsyncadd [#allocation9], %s50
      %s53 = sshll.u32 [#allocation8], 4
      %s54 = int_to_ptr.vmem [resolvable:$true] %s53
      %56 = dma.hbm_to_vmem [thread:$0]  %s3, 16, %s54, [#allocation9]
    $region17: #{tpu_custom_call.1} parent=1 // pred_fallthru
      _
    // Predicated region
    $region18: #{tpu_custom_call.1} parent=1 // pred_check
      _
    $region19: #{tpu_custom_call.1} parent=1 // pred_check_branch
      %58 = sbr.rel (0) target = $region21
    $region20: #{tpu_custom_call.1} parent=1 // pred_region
      %59 = dma.done [#allocation3], 8192
    $region21: #{tpu_custom_call.1} parent=1 // pred_fallthru
      _
    // Predicated region
    $region22: #{tpu_custom_call.1} parent=1 // pred_check
      _
    $region23: #{tpu_custom_call.1} parent=1 // pred_check_branch
      %61 = sbr.rel (0) target = $region25
    $region24: #{tpu_custom_call.1} parent=1 // pred_region
      %62 = dma.done [#allocation6], 2048
    $region25: #{tpu_custom_call.1} parent=1 // pred_fallthru
      _
    // Predicated region
    $region26: #{tpu_custom_call.1} parent=1 // pred_check
      _
    $region27: #{tpu_custom_call.1} parent=1 // pred_check_branch
      %64 = sbr.rel (0) target = $region29
    $region28: #{tpu_custom_call.1} parent=1 // pred_region
      %65 = dma.done [#allocation6], 16
    $region29: #{tpu_custom_call.1} parent=1 // pred_fallthru
      _
    // Predicated region
    $region30: #{tpu_custom_call.1} parent=1 // pred_check
      _
    $region31: #{tpu_custom_call.1} parent=1 // pred_check_branch
      %67 = sbr.rel (0) target = $region33
    $region32: #{tpu_custom_call.1} parent=1 // pred_region
      %68 = dma.done [#allocation9], 16
    $region33: #{tpu_custom_call.1} parent=1 // pred_fallthru
      _
    %v69 = vld [vmem:[#allocation2] sm:$0xff]
    %v70 = vld [vmem:[#allocation2 + $0x8] sm:$0xff]
    %v71 = vld [vmem:[#allocation2 + $0x10] sm:$0xff]
    %v72 = vld [vmem:[#allocation2 + $0x18] sm:$0xff]
    %v73 = vld [vmem:[#allocation2 + $0x20] sm:$0xff]
    %v74 = vld [vmem:[#allocation2 + $0x28] sm:$0xff]
    %v75 = vld [vmem:[#allocation2 + $0x30] sm:$0xff]
    %v76 = vld [vmem:[#allocation2 + $0x38] sm:$0xff]
    %v77 = vld [vmem:[#allocation2 + $0x40] sm:$0xff]
    %v78 = vld [vmem:[#allocation2 + $0x48] sm:$0xff]
    %v79 = vld [vmem:[#allocation2 + $0x50] sm:$0xff]
    %v80 = vld [vmem:[#allocation2 + $0x58] sm:$0xff]
    %v81 = vld [vmem:[#allocation2 + $0x60] sm:$0xff]
    %v82 = vld [vmem:[#allocation2 + $0x68] sm:$0xff]
    %v83 = vld [vmem:[#allocation2 + $0x70] sm:$0xff]
    %v84 = vld [vmem:[#allocation2 + $0x78] sm:$0xff]
    %v85 = vld [vmem:[#allocation2 + $0x80] sm:$0xff]
    %v86 = vld [vmem:[#allocation2 + $0x88] sm:$0xff]
    %v87 = vld [vmem:[#allocation2 + $0x90] sm:$0xff]
    %v88 = vld [vmem:[#allocation2 + $0x98] sm:$0xff]
    %v89 = vld [vmem:[#allocation2 + $0xa0] sm:$0xff]
    %v90 = vld [vmem:[#allocation2 + $0xa8] sm:$0xff]
    %v91 = vld [vmem:[#allocation2 + $0xb0] sm:$0xff]
    %v92 = vld [vmem:[#allocation2 + $0xb8] sm:$0xff]
    %v93 = vld [vmem:[#allocation2 + $0xc0] sm:$0xff]
    %v94 = vld [vmem:[#allocation2 + $0xc8] sm:$0xff]
    %v95 = vld [vmem:[#allocation2 + $0xd0] sm:$0xff]
    %v96 = vld [vmem:[#allocation2 + $0xd8] sm:$0xff]
    %v97 = vld [vmem:[#allocation2 + $0xe0] sm:$0xff]
    %v98 = vld [vmem:[#allocation2 + $0xe8] sm:$0xff]
    %v99 = vld [vmem:[#allocation2 + $0xf0] sm:$0xff]
    %v100 = vld [vmem:[#allocation2 + $0xf8] sm:$0xff]
    %v101 = vld [vmem:[#allocation2 + $0x100] sm:$0xff]
    %v102 = vld [vmem:[#allocation2 + $0x108] sm:$0xff]
    %v103 = vld [vmem:[#allocation2 + $0x110] sm:$0xff]
    %v104 = vld [vmem:[#allocation2 + $0x118] sm:$0xff]
    %v105 = vld [vmem:[#allocation2 + $0x120] sm:$0xff]
    %v106 = vld [vmem:[#allocation2 + $0x128] sm:$0xff]
    %v107 = vld [vmem:[#allocation2 + $0x130] sm:$0xff]
    %v108 = vld [vmem:[#allocation2 + $0x138] sm:$0xff]
    %v109 = vld [vmem:[#allocation2 + $0x140] sm:$0xff]
    %v110 = vld [vmem:[#allocation2 + $0x148] sm:$0xff]
    %v111 = vld [vmem:[#allocation2 + $0x150] sm:$0xff]
    %v112 = vld [vmem:[#allocation2 + $0x158] sm:$0xff]
    %v113 = vld [vmem:[#allocation2 + $0x160] sm:$0xff]
    %v114 = vld [vmem:[#allocation2 + $0x168] sm:$0xff]
    %v115 = vld [vmem:[#allocation2 + $0x170] sm:$0xff]
    %v116 = vld [vmem:[#allocation2 + $0x178] sm:$0xff]
    %v117 = vld [vmem:[#allocation2 + $0x180] sm:$0xff]
    %v118 = vld [vmem:[#allocation2 + $0x188] sm:$0xff]
    %v119 = vld [vmem:[#allocation2 + $0x190] sm:$0xff]
    %v120 = vld [vmem:[#allocation2 + $0x198] sm:$0xff]
    %v121 = vld [vmem:[#allocation2 + $0x1a0] sm:$0xff]
    %v122 = vld [vmem:[#allocation2 + $0x1a8] sm:$0xff]
    %v123 = vld [vmem:[#allocation2 + $0x1b0] sm:$0xff]
    %v124 = vld [vmem:[#allocation2 + $0x1b8] sm:$0xff]
    %v125 = vld [vmem:[#allocation2 + $0x1c0] sm:$0xff]
    %v126 = vld [vmem:[#allocation2 + $0x1c8] sm:$0xff]
    %v127 = vld [vmem:[#allocation2 + $0x1d0] sm:$0xff]
    %v128 = vld [vmem:[#allocation2 + $0x1d8] sm:$0xff]
    %v129 = vld [vmem:[#allocation2 + $0x1e0] sm:$0xff]
    %v130 = vld [vmem:[#allocation2 + $0x1e8] sm:$0xff]
    %v131 = vld [vmem:[#allocation2 + $0x1f0] sm:$0xff]
    %v132 = vld [vmem:[#allocation2 + $0x1f8] sm:$0xff]
    %v133 = vld [vmem:[#allocation5] sm:$0xff]
    %v134 = vld [vmem:[#allocation5 + $0x8] sm:$0xff]
    %v135 = vld [vmem:[#allocation5 + $0x10] sm:$0xff]
    %v136 = vld [vmem:[#allocation5 + $0x18] sm:$0xff]
    %v137 = vld [vmem:[#allocation5 + $0x20] sm:$0xff]
    %v138 = vld [vmem:[#allocation5 + $0x28] sm:$0xff]
    %v139 = vld [vmem:[#allocation5 + $0x30] sm:$0xff]
    %v140 = vld [vmem:[#allocation5 + $0x38] sm:$0xff]
    %v141 = vld [vmem:[#allocation5 + $0x40] sm:$0xff]
    %v142 = vld [vmem:[#allocation5 + $0x48] sm:$0xff]
    %v143 = vld [vmem:[#allocation5 + $0x50] sm:$0xff]
    %v144 = vld [vmem:[#allocation5 + $0x58] sm:$0xff]
    %v145 = vld [vmem:[#allocation5 + $0x60] sm:$0xff]
    %v146 = vld [vmem:[#allocation5 + $0x68] sm:$0xff]
    %v147 = vld [vmem:[#allocation5 + $0x70] sm:$0xff]
    %v148 = vld [vmem:[#allocation5 + $0x78] sm:$0xff]
    %149 = vmatprep.subr.mxu0 0.0
    %150 = vmatpush1.msra.mxu0 %v133
    %151 = vmatprep.subr.mxu0 0.0
    %152 = vmatpush1.msra.mxu0 %v134
    %153 = vmatprep.subr.mxu0 0.0
    %154 = vmatpush1.msra.mxu0 %v135
    %155 = vmatprep.subr.mxu0 0.0
    %156 = vmatpush1.msra.mxu0 %v136
    %157 = vmatprep.subr.mxu0 0.0
    %158 = vmatpush1.msra.mxu0 %v137
    %159 = vmatprep.subr.mxu0 0.0
    %160 = vmatpush1.msra.mxu0 %v138
    %161 = vmatprep.subr.mxu0 0.0
    %162 = vmatpush1.msra.mxu0 %v139
    %163 = vmatprep.subr.mxu0 0.0
    %164 = vmatpush1.msra.mxu0 %v140
    %165 = vmatprep.subr.mxu0 0.0
    %166 = vmatpush1.msra.mxu0 %v141
    %167 = vmatprep.subr.mxu0 0.0
    %168 = vmatpush1.msra.mxu0 %v142
    %169 = vmatprep.subr.mxu0 0.0
    %170 = vmatpush1.msra.mxu0 %v143
    %171 = vmatprep.subr.mxu0 0.0
    %172 = vmatpush1.msra.mxu0 %v144
    %173 = vmatprep.subr.mxu0 0.0
    %174 = vmatpush1.msra.mxu0 %v145
    %175 = vmatprep.subr.mxu0 0.0
    %176 = vmatpush1.msra.mxu0 %v146
    %177 = vmatprep.subr.mxu0 0.0
    %178 = vmatpush1.msra.mxu0 %v147
    %179 = vmatprep.subr.mxu0 0.0
    %180 = vmatpush1.msra.mxu0 %v148
    %181 = vmatprep.subr.mxu0 0.0
    %182 = vmatpush1.msra.mxu0 0.0
    %183 = vmatprep.subr.mxu0 0.0
    %184 = vmatpush1.msra.mxu0 0.0
    %185 = vmatprep.subr.mxu0 0.0
    %186 = vmatpush1.msra.mxu0 0.0
    %187 = vmatprep.subr.mxu0 0.0
    %188 = vmatpush1.msra.mxu0 0.0
    %189 = vmatprep.subr.mxu0 0.0
    %190 = vmatpush1.msra.mxu0 0.0
    %191 = vmatprep.subr.mxu0 0.0
    %192 = vmatpush1.msra.mxu0 0.0
    %193 = vmatprep.subr.mxu0 0.0
    %194 = vmatpush1.msra.mxu0 0.0
    %195 = vmatprep.subr.mxu0 0.0
    %196 = vmatpush1.msra.mxu0 0.0
    %197 = vmatprep.subr.mxu0 0.0
    %198 = vmatpush1.msra.mxu0 0.0
    %199 = vmatprep.subr.mxu0 0.0
    %200 = vmatpush1.msra.mxu0 0.0
    %201 = vmatprep.subr.mxu0 0.0
    %202 = vmatpush1.msra.mxu0 0.0
    %203 = vmatprep.subr.mxu0 0.0
    %204 = vmatpush1.msra.mxu0 0.0
    %205 = vmatprep.subr.mxu0 0.0
    %206 = vmatpush1.msra.mxu0 0.0
    %207 = vmatprep.subr.mxu0 0.0
    %208 = vmatpush1.msra.mxu0 0.0
    %209 = vmatprep.subr.mxu0 0.0
    %210 = vmatpush1.msra.mxu0 0.0
    %211 = vmatprep.subr.mxu0 0.0
    %212 = vmatpush1.msra.mxu0 0.0
    %213 = vmatprep.mubr.f32.mxu0 0.0
    %214 = vmatmul.mubr.f32.gmra.mrb[0].mxu0 %v69
    %v215 = vpop.f32.mrb[0].mxu0
    %v216 = vadd.f32 0.0, %v215
    %v217 = vpop.f32.mrb[0].mxu0
    %218 = vmatprep.mubr.f32.mxu0 0.0
    %219 = vmatmul.mubr.f32.gmra.mrb[0].mxu0 %v70
    %v220 = vpop.f32.mrb[0].mxu0
    %v221 = vadd.f32 0.0, %v220
    %v222 = vpop.f32.mrb[0].mxu0
    %223 = vmatprep.mubr.f32.mxu0 0.0
    %224 = vmatmul.mubr.f32.gmra.mrb[0].mxu0 %v71
    %v225 = vpop.f32.mrb[0].mxu0
    %v226 = vadd.f32 0.0, %v225
    %v227 = vpop.f32.mrb[0].mxu0
    %228 = vmatprep.mubr.f32.mxu0 0.0
    %229 = vmatmul.mubr.f32.gmra.mrb[0].mxu0 %v72
    %v230 = vpop.f32.mrb[0].mxu0
    %v231 = vadd.f32 0.0, %v230
    %v232 = vpop.f32.mrb[0].mxu0
    %233 = vmatprep.mubr.f32.mxu0 0.0
    %234 = vmatmul.mubr.f32.gmra.mrb[0].mxu0 %v73
    %v235 = vpop.f32.mrb[0].mxu0
    %v236 = vadd.f32 0.0, %v235
    %v237 = vpop.f32.mrb[0].mxu0
    %238 = vmatprep.mubr.f32.mxu0 0.0
    %239 = vmatmul.mubr.f32.gmra.mrb[0].mxu0 %v74
    %v240 = vpop.f32.mrb[0].mxu0
    %v241 = vadd.f32 0.0, %v240
    %v242 = vpop.f32.mrb[0].mxu0
    %243 = vmatprep.mubr.f32.mxu0 0.0
    %244 = vmatmul.mubr.f32.gmra.mrb[0].mxu0 %v75
    %v245 = vpop.f32.mrb[0].mxu0
    %v246 = vadd.f32 0.0, %v245
    %v247 = vpop.f32.mrb[0].mxu0
    %248 = vmatprep.mubr.f32.mxu0 0.0
    %249 = vmatmul.mubr.f32.gmra.mrb[0].mxu0 %v76
    %v250 = vpop.f32.mrb[0].mxu0
    %v251 = vadd.f32 0.0, %v250
    %v252 = vpop.f32.mrb[0].mxu0
    %253 = vmatprep.mubr.f32.mxu0 0.0
    %254 = vmatmul.mubr.f32.gmra.mrb[0].mxu0 %v77
    %v255 = vpop.f32.mrb[0].mxu0
    %v256 = vadd.f32 0.0, %v255
    %v257 = vpop.f32.mrb[0].mxu0
    %258 = vmatprep.mubr.f32.mxu0 0.0
    %259 = vmatmul.mubr.f32.gmra.mrb[0].mxu0 %v78
    %v260 = vpop.f32.mrb[0].mxu0
    %v261 = vadd.f32 0.0, %v260
    %v262 = vpop.f32.mrb[0].mxu0
    %263 = vmatprep.mubr.f32.mxu0 0.0
    %264 = vmatmul.mubr.f32.gmra.mrb[0].mxu0 %v79
    %v265 = vpop.f32.mrb[0].mxu0
    %v266 = vadd.f32 0.0, %v265
    %v267 = vpop.f32.mrb[0].mxu0
    %268 = vmatprep.mubr.f32.mxu0 0.0
    %269 = vmatmul.mubr.f32.gmra.mrb[0].mxu0 %v80
    %v270 = vpop.f32.mrb[0].mxu0
    %v271 = vadd.f32 0.0, %v270
    %v272 = vpop.f32.mrb[0].mxu0
    %273 = vmatprep.mubr.f32.mxu0 0.0
    %274 = vmatmul.mubr.f32.gmra.mrb[0].mxu0 %v81
    %v275 = vpop.f32.mrb[0].mxu0
    %v276 = vadd.f32 0.0, %v275
    %v277 = vpop.f32.mrb[0].mxu0
    %278 = vmatprep.mubr.f32.mxu0 0.0
    %279 = vmatmul.mubr.f32.gmra.mrb[0].mxu0 %v82
    %v280 = vpop.f32.mrb[0].mxu0
    %v281 = vadd.f32 0.0, %v280
    %v282 = vpop.f32.mrb[0].mxu0
    %283 = vmatprep.mubr.f32.mxu0 0.0
    %284 = vmatmul.mubr.f32.gmra.mrb[0].mxu0 %v83
    %v285 = vpop.f32.mrb[0].mxu0
    %v286 = vadd.f32 0.0, %v285
    %v287 = vpop.f32.mrb[0].mxu0
    %288 = vmatprep.mubr.f32.mxu0 0.0
    %289 = vmatmul.mubr.f32.gmra.mrb[0].mxu0 %v84
    %v290 = vpop.f32.mrb[0].mxu0
    %v291 = vadd.f32 0.0, %v290
    %v292 = vpop.f32.mrb[0].mxu0
    %293 = vmatprep.mubr.f32.mxu0 0.0
    %294 = vmatmul.mubr.f32.gmra.mrb[0].mxu0 %v85
    %v295 = vpop.f32.mrb[0].mxu0
    %v296 = vadd.f32 0.0, %v295
    %v297 = vpop.f32.mrb[0].mxu0
    %298 = vmatprep.mubr.f32.mxu0 0.0
    %299 = vmatmul.mubr.f32.gmra.mrb[0].mxu0 %v86
    %v300 = vpop.f32.mrb[0].mxu0
    %v301 = vadd.f32 0.0, %v300
    %v302 = vpop.f32.mrb[0].mxu0
    %303 = vmatprep.mubr.f32.mxu0 0.0
    %304 = vmatmul.mubr.f32.gmra.mrb[0].mxu0 %v87
    %v305 = vpop.f32.mrb[0].mxu0
    %v306 = vadd.f32 0.0, %v305
    %v307 = vpop.f32.mrb[0].mxu0
    %308 = vmatprep.mubr.f32.mxu0 0.0
    %309 = vmatmul.mubr.f32.gmra.mrb[0].mxu0 %v88
    %v310 = vpop.f32.mrb[0].mxu0
    %v311 = vadd.f32 0.0, %v310
    %v312 = vpop.f32.mrb[0].mxu0
    %313 = vmatprep.mubr.f32.mxu0 0.0
    %314 = vmatmul.mubr.f32.gmra.mrb[0].mxu0 %v89
    %v315 = vpop.f32.mrb[0].mxu0
    %v316 = vadd.f32 0.0, %v315
    %v317 = vpop.f32.mrb[0].mxu0
    %318 = vmatprep.mubr.f32.mxu0 0.0
    %319 = vmatmul.mubr.f32.gmra.mrb[0].mxu0 %v90
    %v320 = vpop.f32.mrb[0].mxu0
    %v321 = vadd.f32 0.0, %v320
    %v322 = vpop.f32.mrb[0].mxu0
    %323 = vmatprep.mubr.f32.mxu0 0.0
    %324 = vmatmul.mubr.f32.gmra.mrb[0].mxu0 %v91
    %v325 = vpop.f32.mrb[0].mxu0
    %v326 = vadd.f32 0.0, %v325
    %v327 = vpop.f32.mrb[0].mxu0
    %328 = vmatprep.mubr.f32.mxu0 0.0
    %329 = vmatmul.mubr.f32.gmra.mrb[0].mxu0 %v92
    %v330 = vpop.f32.mrb[0].mxu0
    %v331 = vadd.f32 0.0, %v330
    %v332 = vpop.f32.mrb[0].mxu0
    %333 = vmatprep.mubr.f32.mxu0 0.0
    %334 = vmatmul.mubr.f32.gmra.mrb[0].mxu0 %v93
    %v335 = vpop.f32.mrb[0].mxu0
    %v336 = vadd.f32 0.0, %v335
    %v337 = vpop.f32.mrb[0].mxu0
    %338 = vmatprep.mubr.f32.mxu0 0.0
    %339 = vmatmul.mubr.f32.gmra.mrb[0].mxu0 %v94
    %v340 = vpop.f32.mrb[0].mxu0
    %v341 = vadd.f32 0.0, %v340
    %v342 = vpop.f32.mrb[0].mxu0
    %343 = vmatprep.mubr.f32.mxu0 0.0
    %344 = vmatmul.mubr.f32.gmra.mrb[0].mxu0 %v95
    %v345 = vpop.f32.mrb[0].mxu0
    %v346 = vadd.f32 0.0, %v345
    %v347 = vpop.f32.mrb[0].mxu0
    %348 = vmatprep.mubr.f32.mxu0 0.0
    %349 = vmatmul.mubr.f32.gmra.mrb[0].mxu0 %v96
    %v350 = vpop.f32.mrb[0].mxu0
    %v351 = vadd.f32 0.0, %v350
    %v352 = vpop.f32.mrb[0].mxu0
    %353 = vmatprep.mubr.f32.mxu0 0.0
    %354 = vmatmul.mubr.f32.gmra.mrb[0].mxu0 %v97
    %v355 = vpop.f32.mrb[0].mxu0
    %v356 = vadd.f32 0.0, %v355
    %v357 = vpop.f32.mrb[0].mxu0
    %358 = vmatprep.mubr.f32.mxu0 0.0
    %359 = vmatmul.mubr.f32.gmra.mrb[0].mxu0 %v98
    %v360 = vpop.f32.mrb[0].mxu0
    %v361 = vadd.f32 0.0, %v360
    %v362 = vpop.f32.mrb[0].mxu0
    %363 = vmatprep.mubr.f32.mxu0 0.0
    %364 = vmatmul.mubr.f32.gmra.mrb[0].mxu0 %v99
    %v365 = vpop.f32.mrb[0].mxu0
    %v366 = vadd.f32 0.0, %v365
    %v367 = vpop.f32.mrb[0].mxu0
    %368 = vmatprep.mubr.f32.mxu0 0.0
    %369 = vmatmul.mubr.f32.gmra.mrb[0].mxu0 %v100
    %v370 = vpop.f32.mrb[0].mxu0
    %v371 = vadd.f32 0.0, %v370
    %v372 = vpop.f32.mrb[0].mxu0
    %373 = vmatprep.mubr.f32.mxu0 0.0
    %374 = vmatmul.mubr.f32.gmra.mrb[0].mxu0 %v101
    %v375 = vpop.f32.mrb[0].mxu0
    %v376 = vadd.f32 0.0, %v375
    %v377 = vpop.f32.mrb[0].mxu0
    %378 = vmatprep.mubr.f32.mxu0 0.0
    %379 = vmatmul.mubr.f32.gmra.mrb[0].mxu0 %v102
    %v380 = vpop.f32.mrb[0].mxu0
    %v381 = vadd.f32 0.0, %v380
    %v382 = vpop.f32.mrb[0].mxu0
    %383 = vmatprep.mubr.f32.mxu0 0.0
    %384 = vmatmul.mubr.f32.gmra.mrb[0].mxu0 %v103
    %v385 = vpop.f32.mrb[0].mxu0
    %v386 = vadd.f32 0.0, %v385
    %v387 = vpop.f32.mrb[0].mxu0
    %388 = vmatprep.mubr.f32.mxu0 0.0
    %389 = vmatmul.mubr.f32.gmra.mrb[0].mxu0 %v104
    %v390 = vpop.f32.mrb[0].mxu0
    %v391 = vadd.f32 0.0, %v390
    %v392 = vpop.f32.mrb[0].mxu0
    %393 = vmatprep.mubr.f32.mxu0 0.0
    %394 = vmatmul.mubr.f32.gmra.mrb[0].mxu0 %v105
    %v395 = vpop.f32.mrb[0].mxu0
    %v396 = vadd.f32 0.0, %v395
    %v397 = vpop.f32.mrb[0].mxu0
    %398 = vmatprep.mubr.f32.mxu0 0.0
    %399 = vmatmul.mubr.f32.gmra.mrb[0].mxu0 %v106
    %v400 = vpop.f32.mrb[0].mxu0
    %v401 = vadd.f32 0.0, %v400
    %v402 = vpop.f32.mrb[0].mxu0
    %403 = vmatprep.mubr.f32.mxu0 0.0
    %404 = vmatmul.mubr.f32.gmra.mrb[0].mxu0 %v107
    %v405 = vpop.f32.mrb[0].mxu0
    %v406 = vadd.f32 0.0, %v405
    %v407 = vpop.f32.mrb[0].mxu0
    %408 = vmatprep.mubr.f32.mxu0 0.0
    %409 = vmatmul.mubr.f32.gmra.mrb[0].mxu0 %v108
    %v410 = vpop.f32.mrb[0].mxu0
    %v411 = vadd.f32 0.0, %v410
    %v412 = vpop.f32.mrb[0].mxu0
    %413 = vmatprep.mubr.f32.mxu0 0.0
    %414 = vmatmul.mubr.f32.gmra.mrb[0].mxu0 %v109
    %v415 = vpop.f32.mrb[0].mxu0
    %v416 = vadd.f32 0.0, %v415
    %v417 = vpop.f32.mrb[0].mxu0
    %418 = vmatprep.mubr.f32.mxu0 0.0
    %419 = vmatmul.mubr.f32.gmra.mrb[0].mxu0 %v110
    %v420 = vpop.f32.mrb[0].mxu0
    %v421 = vadd.f32 0.0, %v420
    %v422 = vpop.f32.mrb[0].mxu0
    %423 = vmatprep.mubr.f32.mxu0 0.0
    %424 = vmatmul.mubr.f32.gmra.mrb[0].mxu0 %v111
    %v425 = vpop.f32.mrb[0].mxu0
    %v426 = vadd.f32 0.0, %v425
    %v427 = vpop.f32.mrb[0].mxu0
    %428 = vmatprep.mubr.f32.mxu0 0.0
    %429 = vmatmul.mubr.f32.gmra.mrb[0].mxu0 %v112
    %v430 = vpop.f32.mrb[0].mxu0
    %v431 = vadd.f32 0.0, %v430
    %v432 = vpop.f32.mrb[0].mxu0
    %433 = vmatprep.mubr.f32.mxu0 0.0
    %434 = vmatmul.mubr.f32.gmra.mrb[0].mxu0 %v113
    %v435 = vpop.f32.mrb[0].mxu0
    %v436 = vadd.f32 0.0, %v435
    %v437 = vpop.f32.mrb[0].mxu0
    %438 = vmatprep.mubr.f32.mxu0 0.0
    %439 = vmatmul.mubr.f32.gmra.mrb[0].mxu0 %v114
    %v440 = vpop.f32.mrb[0].mxu0
    %v441 = vadd.f32 0.0, %v440
    %v442 = vpop.f32.mrb[0].mxu0
    %443 = vmatprep.mubr.f32.mxu0 0.0
    %444 = vmatmul.mubr.f32.gmra.mrb[0].mxu0 %v115
    %v445 = vpop.f32.mrb[0].mxu0
    %v446 = vadd.f32 0.0, %v445
    %v447 = vpop.f32.mrb[0].mxu0
    %448 = vmatprep.mubr.f32.mxu0 0.0
    %449 = vmatmul.mubr.f32.gmra.mrb[0].mxu0 %v116
    %v450 = vpop.f32.mrb[0].mxu0
    %v451 = vadd.f32 0.0, %v450
    %v452 = vpop.f32.mrb[0].mxu0
    %453 = vmatprep.mubr.f32.mxu0 0.0
    %454 = vmatmul.mubr.f32.gmra.mrb[0].mxu0 %v117
    %v455 = vpop.f32.mrb[0].mxu0
    %v456 = vadd.f32 0.0, %v455
    %v457 = vpop.f32.mrb[0].mxu0
    %458 = vmatprep.mubr.f32.mxu0 0.0
    %459 = vmatmul.mubr.f32.gmra.mrb[0].mxu0 %v118
    %v460 = vpop.f32.mrb[0].mxu0
    %v461 = vadd.f32 0.0, %v460
    %v462 = vpop.f32.mrb[0].mxu0
    %463 = vmatprep.mubr.f32.mxu0 0.0
    %464 = vmatmul.mubr.f32.gmra.mrb[0].mxu0 %v119
    %v465 = vpop.f32.mrb[0].mxu0
    %v466 = vadd.f32 0.0, %v465
    %v467 = vpop.f32.mrb[0].mxu0
    %468 = vmatprep.mubr.f32.mxu0 0.0
    %469 = vmatmul.mubr.f32.gmra.mrb[0].mxu0 %v120
    %v470 = vpop.f32.mrb[0].mxu0
    %v471 = vadd.f32 0.0, %v470
    %v472 = vpop.f32.mrb[0].mxu0
    %473 = vmatprep.mubr.f32.mxu0 0.0
    %474 = vmatmul.mubr.f32.gmra.mrb[0].mxu0 %v121
    %v475 = vpop.f32.mrb[0].mxu0
    %v476 = vadd.f32 0.0, %v475
    %v477 = vpop.f32.mrb[0].mxu0
    %478 = vmatprep.mubr.f32.mxu0 0.0
    %479 = vmatmul.mubr.f32.gmra.mrb[0].mxu0 %v122
    %v480 = vpop.f32.mrb[0].mxu0
    %v481 = vadd.f32 0.0, %v480
    %v482 = vpop.f32.mrb[0].mxu0
    %483 = vmatprep.mubr.f32.mxu0 0.0
    %484 = vmatmul.mubr.f32.gmra.mrb[0].mxu0 %v123
    %v485 = vpop.f32.mrb[0].mxu0
    %v486 = vadd.f32 0.0, %v485
    %v487 = vpop.f32.mrb[0].mxu0
    %488 = vmatprep.mubr.f32.mxu0 0.0
    %489 = vmatmul.mubr.f32.gmra.mrb[0].mxu0 %v124
    %v490 = vpop.f32.mrb[0].mxu0
    %v491 = vadd.f32 0.0, %v490
    %v492 = vpop.f32.mrb[0].mxu0
    %493 = vmatprep.mubr.f32.mxu0 0.0
    %494 = vmatmul.mubr.f32.gmra.mrb[0].mxu0 %v125
    %v495 = vpop.f32.mrb[0].mxu0
    %v496 = vadd.f32 0.0, %v495
    %v497 = vpop.f32.mrb[0].mxu0
    %498 = vmatprep.mubr.f32.mxu0 0.0
    %499 = vmatmul.mubr.f32.gmra.mrb[0].mxu0 %v126
    %v500 = vpop.f32.mrb[0].mxu0
    %v501 = vadd.f32 0.0, %v500
    %v502 = vpop.f32.mrb[0].mxu0
    %503 = vmatprep.mubr.f32.mxu0 0.0
    %504 = vmatmul.mubr.f32.gmra.mrb[0].mxu0 %v127
    %v505 = vpop.f32.mrb[0].mxu0
    %v506 = vadd.f32 0.0, %v505
    %v507 = vpop.f32.mrb[0].mxu0
    %508 = vmatprep.mubr.f32.mxu0 0.0
    %509 = vmatmul.mubr.f32.gmra.mrb[0].mxu0 %v128
    %v510 = vpop.f32.mrb[0].mxu0
    %v511 = vadd.f32 0.0, %v510
    %v512 = vpop.f32.mrb[0].mxu0
    %513 = vmatprep.mubr.f32.mxu0 0.0
    %514 = vmatmul.mubr.f32.gmra.mrb[0].mxu0 %v129
    %v515 = vpop.f32.mrb[0].mxu0
    %v516 = vadd.f32 0.0, %v515
    %v517 = vpop.f32.mrb[0].mxu0
    %518 = vmatprep.mubr.f32.mxu0 0.0
    %519 = vmatmul.mubr.f32.gmra.mrb[0].mxu0 %v130
    %v520 = vpop.f32.mrb[0].mxu0
    %v521 = vadd.f32 0.0, %v520
    %v522 = vpop.f32.mrb[0].mxu0
    %523 = vmatprep.mubr.f32.mxu0 0.0
    %524 = vmatmul.mubr.f32.gmra.mrb[0].mxu0 %v131
    %v525 = vpop.f32.mrb[0].mxu0
    %v526 = vadd.f32 0.0, %v525
    %v527 = vpop.f32.mrb[0].mxu0
    %528 = vmatprep.mubr.f32.mxu0 0.0
    %529 = vmatmul.mubr.f32.gmra.mrb[0].mxu0 %v132
    %v530 = vpop.f32.mrb[0].mxu0
    %v531 = vadd.f32 0.0, %v530
    %v532 = vpop.f32.mrb[0].mxu0
    %533 = vdwg.mxu0
    %p534 = scmp.eq.s32.totalorder 0, 0
    // Predicated region
    $region34: #{tpu_custom_call.1} parent=1 // pred_check
      %p535 = pneg %p534
    $region35: #{tpu_custom_call.1} parent=1 // pred_check_branch
      %537 = sbr.rel (%p535) target = $region37
    $region36: #{tpu_custom_call.1} parent=1 // pred_region
      %538 = vst [vmem:[#allocation10] sm:$0xff] %v216
      %539 = vst [vmem:[#allocation10 + $0x8] sm:$0xff] %v221
      %540 = vst [vmem:[#allocation10 + $0x10] sm:$0xff] %v226
      %541 = vst [vmem:[#allocation10 + $0x18] sm:$0xff] %v231
      %542 = vst [vmem:[#allocation10 + $0x20] sm:$0xff] %v236
      %543 = vst [vmem:[#allocation10 + $0x28] sm:$0xff] %v241
      %544 = vst [vmem:[#allocation10 + $0x30] sm:$0xff] %v246
      %545 = vst [vmem:[#allocation10 + $0x38] sm:$0xff] %v251
      %546 = vst [vmem:[#allocation10 + $0x40] sm:$0xff] %v256
      %547 = vst [vmem:[#allocation10 + $0x48] sm:$0xff] %v261
      %548 = vst [vmem:[#allocation10 + $0x50] sm:$0xff] %v266
      %549 = vst [vmem:[#allocation10 + $0x58] sm:$0xff] %v271
      %550 = vst [vmem:[#allocation10 + $0x60] sm:$0xff] %v276
      %551 = vst [vmem:[#allocation10 + $0x68] sm:$0xff] %v281
      %552 = vst [vmem:[#allocation10 + $0x70] sm:$0xff] %v286
      %553 = vst [vmem:[#allocation10 + $0x78] sm:$0xff] %v291
      %554 = vst [vmem:[#allocation10 + $0x80] sm:$0xff] %v296
      %555 = vst [vmem:[#allocation10 + $0x88] sm:$0xff] %v301
      %556 = vst [vmem:[#allocation10 + $0x90] sm:$0xff] %v306
      %557 = vst [vmem:[#allocation10 + $0x98] sm:$0xff] %v311
      %558 = vst [vmem:[#allocation10 + $0xa0] sm:$0xff] %v316
      %559 = vst [vmem:[#allocation10 + $0xa8] sm:$0xff] %v321
      %560 = vst [vmem:[#allocation10 + $0xb0] sm:$0xff] %v326
      %561 = vst [vmem:[#allocation10 + $0xb8] sm:$0xff] %v331
      %562 = vst [vmem:[#allocation10 + $0xc0] sm:$0xff] %v336
      %563 = vst [vmem:[#allocation10 + $0xc8] sm:$0xff] %v341
      %564 = vst [vmem:[#allocation10 + $0xd0] sm:$0xff] %v346
      %565 = vst [vmem:[#allocation10 + $0xd8] sm:$0xff] %v351
      %566 = vst [vmem:[#allocation10 + $0xe0] sm:$0xff] %v356
      %567 = vst [vmem:[#allocation10 + $0xe8] sm:$0xff] %v361
      %568 = vst [vmem:[#allocation10 + $0xf0] sm:$0xff] %v366
      %569 = vst [vmem:[#allocation10 + $0xf8] sm:$0xff] %v371
      %570 = vst [vmem:[#allocation10 + $0x100] sm:$0xff] %v376
      %571 = vst [vmem:[#allocation10 + $0x108] sm:$0xff] %v381
      %572 = vst [vmem:[#allocation10 + $0x110] sm:$0xff] %v386
      %573 = vst [vmem:[#allocation10 + $0x118] sm:$0xff] %v391
      %574 = vst [vmem:[#allocation10 + $0x120] sm:$0xff] %v396
      %575 = vst [vmem:[#allocation10 + $0x128] sm:$0xff] %v401
      %576 = vst [vmem:[#allocation10 + $0x130] sm:$0xff] %v406
      %577 = vst [vmem:[#allocation10 + $0x138] sm:$0xff] %v411
      %578 = vst [vmem:[#allocation10 + $0x140] sm:$0xff] %v416
      %579 = vst [vmem:[#allocation10 + $0x148] sm:$0xff] %v421
      %580 = vst [vmem:[#allocation10 + $0x150] sm:$0xff] %v426
      %581 = vst [vmem:[#allocation10 + $0x158] sm:$0xff] %v431
      %582 = vst [vmem:[#allocation10 + $0x160] sm:$0xff] %v436
      %583 = vst [vmem:[#allocation10 + $0x168] sm:$0xff] %v441
      %584 = vst [vmem:[#allocation10 + $0x170] sm:$0xff] %v446
      %585 = vst [vmem:[#allocation10 + $0x178] sm:$0xff] %v451
      %586 = vst [vmem:[#allocation10 + $0x180] sm:$0xff] %v456
      %587 = vst [vmem:[#allocation10 + $0x188] sm:$0xff] %v461
      %588 = vst [vmem:[#allocation10 + $0x190] sm:$0xff] %v466
      %589 = vst [vmem:[#allocation10 + $0x198] sm:$0xff] %v471
      %590 = vst [vmem:[#allocation10 + $0x1a0] sm:$0xff] %v476
      %591 = vst [vmem:[#allocation10 + $0x1a8] sm:$0xff] %v481
      %592 = vst [vmem:[#allocation10 + $0x1b0] sm:$0xff] %v486
      %593 = vst [vmem:[#allocation10 + $0x1b8] sm:$0xff] %v491
      %594 = vst [vmem:[#allocation10 + $0x1c0] sm:$0xff] %v496
      %595 = vst [vmem:[#allocation10 + $0x1c8] sm:$0xff] %v501
      %596 = vst [vmem:[#allocation10 + $0x1d0] sm:$0xff] %v506
      %597 = vst [vmem:[#allocation10 + $0x1d8] sm:$0xff] %v511
      %598 = vst [vmem:[#allocation10 + $0x1e0] sm:$0xff] %v516
      %599 = vst [vmem:[#allocation10 + $0x1e8] sm:$0xff] %v521
      %600 = vst [vmem:[#allocation10 + $0x1f0] sm:$0xff] %v526
      %601 = vst [vmem:[#allocation10 + $0x1f8] sm:$0xff] %v531
    $region37: #{tpu_custom_call.1} parent=1 // pred_fallthru
      _
    %p602 = scmp.gt.s32.totalorder 0, 0
    // Predicated region
    $region38: #{tpu_custom_call.1} parent=1 // pred_check
      %p603 = pneg %p602
    $region39: #{tpu_custom_call.1} parent=1 // pred_check_branch
      %605 = sbr.rel (%p603) target = $region41
    $region40: #{tpu_custom_call.1} parent=1 // pred_region
      %v606 = vld [vmem:[#allocation10] sm:$0xff]
      %v607 = vld [vmem:[#allocation10 + $0x8] sm:$0xff]
      %v608 = vld [vmem:[#allocation10 + $0x10] sm:$0xff]
      %v609 = vld [vmem:[#allocation10 + $0x18] sm:$0xff]
      %v610 = vld [vmem:[#allocation10 + $0x20] sm:$0xff]
      %v611 = vld [vmem:[#allocation10 + $0x28] sm:$0xff]
      %v612 = vld [vmem:[#allocation10 + $0x30] sm:$0xff]
      %v613 = vld [vmem:[#allocation10 + $0x38] sm:$0xff]
      %v614 = vld [vmem:[#allocation10 + $0x40] sm:$0xff]
      %v615 = vld [vmem:[#allocation10 + $0x48] sm:$0xff]
      %v616 = vld [vmem:[#allocation10 + $0x50] sm:$0xff]
      %v617 = vld [vmem:[#allocation10 + $0x58] sm:$0xff]
      %v618 = vld [vmem:[#allocation10 + $0x60] sm:$0xff]
      %v619 = vld [vmem:[#allocation10 + $0x68] sm:$0xff]
      %v620 = vld [vmem:[#allocation10 + $0x70] sm:$0xff]
      %v621 = vld [vmem:[#allocation10 + $0x78] sm:$0xff]
      %v622 = vld [vmem:[#allocation10 + $0x80] sm:$0xff]
      %v623 = vld [vmem:[#allocation10 + $0x88] sm:$0xff]
      %v624 = vld [vmem:[#allocation10 + $0x90] sm:$0xff]
      %v625 = vld [vmem:[#allocation10 + $0x98] sm:$0xff]
      %v626 = vld [vmem:[#allocation10 + $0xa0] sm:$0xff]
      %v627 = vld [vmem:[#allocation10 + $0xa8] sm:$0xff]
      %v628 = vld [vmem:[#allocation10 + $0xb0] sm:$0xff]
      %v629 = vld [vmem:[#allocation10 + $0xb8] sm:$0xff]
      %v630 = vld [vmem:[#allocation10 + $0xc0] sm:$0xff]
      %v631 = vld [vmem:[#allocation10 + $0xc8] sm:$0xff]
      %v632 = vld [vmem:[#allocation10 + $0xd0] sm:$0xff]
      %v633 = vld [vmem:[#allocation10 + $0xd8] sm:$0xff]
      %v634 = vld [vmem:[#allocation10 + $0xe0] sm:$0xff]
      %v635 = vld [vmem:[#allocation10 + $0xe8] sm:$0xff]
      %v636 = vld [vmem:[#allocation10 + $0xf0] sm:$0xff]
      %v637 = vld [vmem:[#allocation10 + $0xf8] sm:$0xff]
      %v638 = vld [vmem:[#allocation10 + $0x100] sm:$0xff]
      %v639 = vld [vmem:[#allocation10 + $0x108] sm:$0xff]
      %v640 = vld [vmem:[#allocation10 + $0x110] sm:$0xff]
      %v641 = vld [vmem:[#allocation10 + $0x118] sm:$0xff]
      %v642 = vld [vmem:[#allocation10 + $0x120] sm:$0xff]
      %v643 = vld [vmem:[#allocation10 + $0x128] sm:$0xff]
      %v644 = vld [vmem:[#allocation10 + $0x130] sm:$0xff]
      %v645 = vld [vmem:[#allocation10 + $0x138] sm:$0xff]
      %v646 = vld [vmem:[#allocation10 + $0x140] sm:$0xff]
      %v647 = vld [vmem:[#allocation10 + $0x148] sm:$0xff]
      %v648 = vld [vmem:[#allocation10 + $0x150] sm:$0xff]
      %v649 = vld [vmem:[#allocation10 + $0x158] sm:$0xff]
      %v650 = vld [vmem:[#allocation10 + $0x160] sm:$0xff]
      %v651 = vld [vmem:[#allocation10 + $0x168] sm:$0xff]
      %v652 = vld [vmem:[#allocation10 + $0x170] sm:$0xff]
      %v653 = vld [vmem:[#allocation10 + $0x178] sm:$0xff]
      %v654 = vld [vmem:[#allocation10 + $0x180] sm:$0xff]
      %v655 = vld [vmem:[#allocation10 + $0x188] sm:$0xff]
      %v656 = vld [vmem:[#allocation10 + $0x190] sm:$0xff]
      %v657 = vld [vmem:[#allocation10 + $0x198] sm:$0xff]
      %v658 = vld [vmem:[#allocation10 + $0x1a0] sm:$0xff]
      %v659 = vld [vmem:[#allocation10 + $0x1a8] sm:$0xff]
      %v660 = vld [vmem:[#allocation10 + $0x1b0] sm:$0xff]
      %v661 = vld [vmem:[#allocation10 + $0x1b8] sm:$0xff]
      %v662 = vld [vmem:[#allocation10 + $0x1c0] sm:$0xff]
      %v663 = vld [vmem:[#allocation10 + $0x1c8] sm:$0xff]
      %v664 = vld [vmem:[#allocation10 + $0x1d0] sm:$0xff]
      %v665 = vld [vmem:[#allocation10 + $0x1d8] sm:$0xff]
      %v666 = vld [vmem:[#allocation10 + $0x1e0] sm:$0xff]
      %v667 = vld [vmem:[#allocation10 + $0x1e8] sm:$0xff]
      %v668 = vld [vmem:[#allocation10 + $0x1f0] sm:$0xff]
      %v669 = vld [vmem:[#allocation10 + $0x1f8] sm:$0xff]
      %v670 = vadd.f32 %v606, %v216
      %v671 = vadd.f32 %v607, %v221
      %v672 = vadd.f32 %v608, %v226
      %v673 = vadd.f32 %v609, %v231
      %v674 = vadd.f32 %v610, %v236
      %v675 = vadd.f32 %v611, %v241
      %v676 = vadd.f32 %v612, %v246
      %v677 = vadd.f32 %v613, %v251
      %v678 = vadd.f32 %v614, %v256
      %v679 = vadd.f32 %v615, %v261
      %v680 = vadd.f32 %v616, %v266
      %v681 = vadd.f32 %v617, %v271
      %v682 = vadd.f32 %v618, %v276
      %v683 = vadd.f32 %v619, %v281
      %v684 = vadd.f32 %v620, %v286
      %v685 = vadd.f32 %v621, %v291
      %v686 = vadd.f32 %v622, %v296
      %v687 = vadd.f32 %v623, %v301
      %v688 = vadd.f32 %v624, %v306
      %v689 = vadd.f32 %v625, %v311
      %v690 = vadd.f32 %v626, %v316
      %v691 = vadd.f32 %v627, %v321
      %v692 = vadd.f32 %v628, %v326
      %v693 = vadd.f32 %v629, %v331
      %v694 = vadd.f32 %v630, %v336
      %v695 = vadd.f32 %v631, %v341
      %v696 = vadd.f32 %v632, %v346
      %v697 = vadd.f32 %v633, %v351
      %v698 = vadd.f32 %v634, %v356
      %v699 = vadd.f32 %v635, %v361
      %v700 = vadd.f32 %v636, %v366
      %v701 = vadd.f32 %v637, %v371
      %v702 = vadd.f32 %v638, %v376
      %v703 = vadd.f32 %v639, %v381
      %v704 = vadd.f32 %v640, %v386
      %v705 = vadd.f32 %v641, %v391
      %v706 = vadd.f32 %v642, %v396
      %v707 = vadd.f32 %v643, %v401
      %v708 = vadd.f32 %v644, %v406
      %v709 = vadd.f32 %v645, %v411
      %v710 = vadd.f32 %v646, %v416
      %v711 = vadd.f32 %v647, %v421
      %v712 = vadd.f32 %v648, %v426
      %v713 = vadd.f32 %v649, %v431
      %v714 = vadd.f32 %v650, %v436
      %v715 = vadd.f32 %v651, %v441
      %v716 = vadd.f32 %v652, %v446
      %v717 = vadd.f32 %v653, %v451
      %v718 = vadd.f32 %v654, %v456
      %v719 = vadd.f32 %v655, %v461
      %v720 = vadd.f32 %v656, %v466
      %v721 = vadd.f32 %v657, %v471
      %v722 = vadd.f32 %v658, %v476
      %v723 = vadd.f32 %v659, %v481
      %v724 = vadd.f32 %v660, %v486
      %v725 = vadd.f32 %v661, %v491
      %v726 = vadd.f32 %v662, %v496
      %v727 = vadd.f32 %v663, %v501
      %v728 = vadd.f32 %v664, %v506
      %v729 = vadd.f32 %v665, %v511
      %v730 = vadd.f32 %v666, %v516
      %v731 = vadd.f32 %v667, %v521
      %v732 = vadd.f32 %v668, %v526
      %v733 = vadd.f32 %v669, %v531
      %734 = vst [vmem:[#allocation10] sm:$0xff] %v670
      %735 = vst [vmem:[#allocation10 + $0x8] sm:$0xff] %v671
      %736 = vst [vmem:[#allocation10 + $0x10] sm:$0xff] %v672
      %737 = vst [vmem:[#allocation10 + $0x18] sm:$0xff] %v673
      %738 = vst [vmem:[#allocation10 + $0x20] sm:$0xff] %v674
      %739 = vst [vmem:[#allocation10 + $0x28] sm:$0xff] %v675
      %740 = vst [vmem:[#allocation10 + $0x30] sm:$0xff] %v676
      %741 = vst [vmem:[#allocation10 + $0x38] sm:$0xff] %v677
      %742 = vst [vmem:[#allocation10 + $0x40] sm:$0xff] %v678
      %743 = vst [vmem:[#allocation10 + $0x48] sm:$0xff] %v679
      %744 = vst [vmem:[#allocation10 + $0x50] sm:$0xff] %v680
      %745 = vst [vmem:[#allocation10 + $0x58] sm:$0xff] %v681
      %746 = vst [vmem:[#allocation10 + $0x60] sm:$0xff] %v682
      %747 = vst [vmem:[#allocation10 + $0x68] sm:$0xff] %v683
      %748 = vst [vmem:[#allocation10 + $0x70] sm:$0xff] %v684
      %749 = vst [vmem:[#allocation10 + $0x78] sm:$0xff] %v685
      %750 = vst [vmem:[#allocation10 + $0x80] sm:$0xff] %v686
      %751 = vst [vmem:[#allocation10 + $0x88] sm:$0xff] %v687
      %752 = vst [vmem:[#allocation10 + $0x90] sm:$0xff] %v688
      %753 = vst [vmem:[#allocation10 + $0x98] sm:$0xff] %v689
      %754 = vst [vmem:[#allocation10 + $0xa0] sm:$0xff] %v690
      %755 = vst [vmem:[#allocation10 + $0xa8] sm:$0xff] %v691
      %756 = vst [vmem:[#allocation10 + $0xb0] sm:$0xff] %v692
      %757 = vst [vmem:[#allocation10 + $0xb8] sm:$0xff] %v693
      %758 = vst [vmem:[#allocation10 + $0xc0] sm:$0xff] %v694
      %759 = vst [vmem:[#allocation10 + $0xc8] sm:$0xff] %v695
      %760 = vst [vmem:[#allocation10 + $0xd0] sm:$0xff] %v696
      %761 = vst [vmem:[#allocation10 + $0xd8] sm:$0xff] %v697
      %762 = vst [vmem:[#allocation10 + $0xe0] sm:$0xff] %v698
      %763 = vst [vmem:[#allocation10 + $0xe8] sm:$0xff] %v699
      %764 = vst [vmem:[#allocation10 + $0xf0] sm:$0xff] %v700
      %765 = vst [vmem:[#allocation10 + $0xf8] sm:$0xff] %v701
      %766 = vst [vmem:[#allocation10 + $0x100] sm:$0xff] %v702
      %767 = vst [vmem:[#allocation10 + $0x108] sm:$0xff] %v703
      %768 = vst [vmem:[#allocation10 + $0x110] sm:$0xff] %v704
      %769 = vst [vmem:[#allocation10 + $0x118] sm:$0xff] %v705
      %770 = vst [vmem:[#allocation10 + $0x120] sm:$0xff] %v706
      %771 = vst [vmem:[#allocation10 + $0x128] sm:$0xff] %v707
      %772 = vst [vmem:[#allocation10 + $0x130] sm:$0xff] %v708
      %773 = vst [vmem:[#allocation10 + $0x138] sm:$0xff] %v709
      %774 = vst [vmem:[#allocation10 + $0x140] sm:$0xff] %v710
      %775 = vst [vmem:[#allocation10 + $0x148] sm:$0xff] %v711
      %776 = vst [vmem:[#allocation10 + $0x150] sm:$0xff] %v712
      %777 = vst [vmem:[#allocation10 + $0x158] sm:$0xff] %v713
      %778 = vst [vmem:[#allocation10 + $0x160] sm:$0xff] %v714
      %779 = vst [vmem:[#allocation10 + $0x168] sm:$0xff] %v715
      %780 = vst [vmem:[#allocation10 + $0x170] sm:$0xff] %v716
      %781 = vst [vmem:[#allocation10 + $0x178] sm:$0xff] %v717
      %782 = vst [vmem:[#allocation10 + $0x180] sm:$0xff] %v718
      %783 = vst [vmem:[#allocation10 + $0x188] sm:$0xff] %v719
      %784 = vst [vmem:[#allocation10 + $0x190] sm:$0xff] %v720
      %785 = vst [vmem:[#allocation10 + $0x198] sm:$0xff] %v721
      %786 = vst [vmem:[#allocation10 + $0x1a0] sm:$0xff] %v722
      %787 = vst [vmem:[#allocation10 + $0x1a8] sm:$0xff] %v723
      %788 = vst [vmem:[#allocation10 + $0x1b0] sm:$0xff] %v724
      %789 = vst [vmem:[#allocation10 + $0x1b8] sm:$0xff] %v725
      %790 = vst [vmem:[#allocation10 + $0x1c0] sm:$0xff] %v726
      %791 = vst [vmem:[#allocation10 + $0x1c8] sm:$0xff] %v727
      %792 = vst [vmem:[#allocation10 + $0x1d0] sm:$0xff] %v728
      %793 = vst [vmem:[#allocation10 + $0x1d8] sm:$0xff] %v729
      %794 = vst [vmem:[#allocation10 + $0x1e0] sm:$0xff] %v730
      %795 = vst [vmem:[#allocation10 + $0x1e8] sm:$0xff] %v731
      %796 = vst [vmem:[#allocation10 + $0x1f0] sm:$0xff] %v732
      %797 = vst [vmem:[#allocation10 + $0x1f8] sm:$0xff] %v733
    $region41: #{tpu_custom_call.1} parent=1 // pred_fallthru
      _
    // Predicated region
    $region42: #{tpu_custom_call.1} parent=1 // pred_check
      %p798 = pneg %p534
    $region43: #{tpu_custom_call.1} parent=1 // pred_check_branch
      %800 = sbr.rel (%p798) target = $region45
    $region44: #{tpu_custom_call.1} parent=1 // pred_region
      %v801 = vld [vmem:[#allocation10] sm:$0xff]
      %v802 = vld [vmem:[#allocation10 + $0x8] sm:$0xff]
      %v803 = vld [vmem:[#allocation10 + $0x10] sm:$0xff]
      %v804 = vld [vmem:[#allocation10 + $0x18] sm:$0xff]
      %v805 = vld [vmem:[#allocation10 + $0x20] sm:$0xff]
      %v806 = vld [vmem:[#allocation10 + $0x28] sm:$0xff]
      %v807 = vld [vmem:[#allocation10 + $0x30] sm:$0xff]
      %v808 = vld [vmem:[#allocation10 + $0x38] sm:$0xff]
      %v809 = vld [vmem:[#allocation10 + $0x40] sm:$0xff]
      %v810 = vld [vmem:[#allocation10 + $0x48] sm:$0xff]
      %v811 = vld [vmem:[#allocation10 + $0x50] sm:$0xff]
      %v812 = vld [vmem:[#allocation10 + $0x58] sm:$0xff]
      %v813 = vld [vmem:[#allocation10 + $0x60] sm:$0xff]
      %v814 = vld [vmem:[#allocation10 + $0x68] sm:$0xff]
      %v815 = vld [vmem:[#allocation10 + $0x70] sm:$0xff]
      %v816 = vld [vmem:[#allocation10 + $0x78] sm:$0xff]
      %v817 = vld [vmem:[#allocation10 + $0x80] sm:$0xff]
      %v818 = vld [vmem:[#allocation10 + $0x88] sm:$0xff]
      %v819 = vld [vmem:[#allocation10 + $0x90] sm:$0xff]
      %v820 = vld [vmem:[#allocation10 + $0x98] sm:$0xff]
      %v821 = vld [vmem:[#allocation10 + $0xa0] sm:$0xff]
      %v822 = vld [vmem:[#allocation10 + $0xa8] sm:$0xff]
      %v823 = vld [vmem:[#allocation10 + $0xb0] sm:$0xff]
      %v824 = vld [vmem:[#allocation10 + $0xb8] sm:$0xff]
      %v825 = vld [vmem:[#allocation10 + $0xc0] sm:$0xff]
      %v826 = vld [vmem:[#allocation10 + $0xc8] sm:$0xff]
      %v827 = vld [vmem:[#allocation10 + $0xd0] sm:$0xff]
      %v828 = vld [vmem:[#allocation10 + $0xd8] sm:$0xff]
      %v829 = vld [vmem:[#allocation10 + $0xe0] sm:$0xff]
      %v830 = vld [vmem:[#allocation10 + $0xe8] sm:$0xff]
      %v831 = vld [vmem:[#allocation10 + $0xf0] sm:$0xff]
      %v832 = vld [vmem:[#allocation10 + $0xf8] sm:$0xff]
      %v833 = vld [vmem:[#allocation10 + $0x100] sm:$0xff]
      %v834 = vld [vmem:[#allocation10 + $0x108] sm:$0xff]
      %v835 = vld [vmem:[#allocation10 + $0x110] sm:$0xff]
      %v836 = vld [vmem:[#allocation10 + $0x118] sm:$0xff]
      %v837 = vld [vmem:[#allocation10 + $0x120] sm:$0xff]
      %v838 = vld [vmem:[#allocation10 + $0x128] sm:$0xff]
      %v839 = vld [vmem:[#allocation10 + $0x130] sm:$0xff]
      %v840 = vld [vmem:[#allocation10 + $0x138] sm:$0xff]
      %v841 = vld [vmem:[#allocation10 + $0x140] sm:$0xff]
      %v842 = vld [vmem:[#allocation10 + $0x148] sm:$0xff]
      %v843 = vld [vmem:[#allocation10 + $0x150] sm:$0xff]
      %v844 = vld [vmem:[#allocation10 + $0x158] sm:$0xff]
      %v845 = vld [vmem:[#allocation10 + $0x160] sm:$0xff]
      %v846 = vld [vmem:[#allocation10 + $0x168] sm:$0xff]
      %v847 = vld [vmem:[#allocation10 + $0x170] sm:$0xff]
      %v848 = vld [vmem:[#allocation10 + $0x178] sm:$0xff]
      %v849 = vld [vmem:[#allocation10 + $0x180] sm:$0xff]
      %v850 = vld [vmem:[#allocation10 + $0x188] sm:$0xff]
      %v851 = vld [vmem:[#allocation10 + $0x190] sm:$0xff]
      %v852 = vld [vmem:[#allocation10 + $0x198] sm:$0xff]
      %v853 = vld [vmem:[#allocation10 + $0x1a0] sm:$0xff]
      %v854 = vld [vmem:[#allocation10 + $0x1a8] sm:$0xff]
      %v855 = vld [vmem:[#allocation10 + $0x1b0] sm:$0xff]
      %v856 = vld [vmem:[#allocation10 + $0x1b8] sm:$0xff]
      %v857 = vld [vmem:[#allocation10 + $0x1c0] sm:$0xff]
      %v858 = vld [vmem:[#allocation10 + $0x1c8] sm:$0xff]
      %v859 = vld [vmem:[#allocation10 + $0x1d0] sm:$0xff]
      %v860 = vld [vmem:[#allocation10 + $0x1d8] sm:$0xff]
      %v861 = vld [vmem:[#allocation10 + $0x1e0] sm:$0xff]
      %v862 = vld [vmem:[#allocation10 + $0x1e8] sm:$0xff]
      %v863 = vld [vmem:[#allocation10 + $0x1f0] sm:$0xff]
      %v864 = vld [vmem:[#allocation10 + $0x1f8] sm:$0xff]
      %v865 = vld [vmem:[#allocation7] sm:$0x1]
      %v867 = vlaneseq
      %v868 = vshrl.u32 %v867, 7
      %v869 = vsub.s32 0, %v868
      %v870 = vrot.slane %v865, %v869
      %v872 = vmul.f32 %v801, %v870
      %v873 = vmul.f32 %v802, %v870
      %v874 = vmul.f32 %v803, %v870
      %v875 = vmul.f32 %v804, %v870
      %v876 = vmul.f32 %v805, %v870
      %v877 = vmul.f32 %v806, %v870
      %v878 = vmul.f32 %v807, %v870
      %v879 = vmul.f32 %v808, %v870
      %v880 = vmul.f32 %v809, %v870
      %v881 = vmul.f32 %v810, %v870
      %v882 = vmul.f32 %v811, %v870
      %v883 = vmul.f32 %v812, %v870
      %v884 = vmul.f32 %v813, %v870
      %v885 = vmul.f32 %v814, %v870
      %v886 = vmul.f32 %v815, %v870
      %v887 = vmul.f32 %v816, %v870
      %v888 = vmul.f32 %v817, %v870
      %v889 = vmul.f32 %v818, %v870
      %v890 = vmul.f32 %v819, %v870
      %v891 = vmul.f32 %v820, %v870
      %v892 = vmul.f32 %v821, %v870
      %v893 = vmul.f32 %v822, %v870
      %v894 = vmul.f32 %v823, %v870
      %v895 = vmul.f32 %v824, %v870
      %v896 = vmul.f32 %v825, %v870
      %v897 = vmul.f32 %v826, %v870
      %v898 = vmul.f32 %v827, %v870
      %v899 = vmul.f32 %v828, %v870
      %v900 = vmul.f32 %v829, %v870
      %v901 = vmul.f32 %v830, %v870
      %v902 = vmul.f32 %v831, %v870
      %v903 = vmul.f32 %v832, %v870
      %v904 = vmul.f32 %v833, %v870
      %v905 = vmul.f32 %v834, %v870
      %v906 = vmul.f32 %v835, %v870
      %v907 = vmul.f32 %v836, %v870
      %v908 = vmul.f32 %v837, %v870
      %v909 = vmul.f32 %v838, %v870
      %v910 = vmul.f32 %v839, %v870
      %v911 = vmul.f32 %v840, %v870
      %v912 = vmul.f32 %v841, %v870
      %v913 = vmul.f32 %v842, %v870
      %v914 = vmul.f32 %v843, %v870
      %v915 = vmul.f32 %v844, %v870
      %v916 = vmul.f32 %v845, %v870
      %v917 = vmul.f32 %v846, %v870
      %v918 = vmul.f32 %v847, %v870
      %v919 = vmul.f32 %v848, %v870
      %v920 = vmul.f32 %v849, %v870
      %v921 = vmul.f32 %v850, %v870
      %v922 = vmul.f32 %v851, %v870
      %v923 = vmul.f32 %v852, %v870
      %v924 = vmul.f32 %v853, %v870
      %v925 = vmul.f32 %v854, %v870
      %v926 = vmul.f32 %v855, %v870
      %v927 = vmul.f32 %v856, %v870
      %v928 = vmul.f32 %v857, %v870
      %v929 = vmul.f32 %v858, %v870
      %v930 = vmul.f32 %v859, %v870
      %v931 = vmul.f32 %v860, %v870
      %v932 = vmul.f32 %v861, %v870
      %v933 = vmul.f32 %v862, %v870
      %v934 = vmul.f32 %v863, %v870
      %v935 = vmul.f32 %v864, %v870
      %v936 = vld [vmem:[#allocation8] sm:$0x1]
      %v938 = vlaneseq
      %v939 = vshrl.u32 %v938, 7
      %v940 = vsub.s32 0, %v939
      %v941 = vrot.slane %v936, %v940
      %v943 = vadd.f32 %v872, %v941
      %v944 = vadd.f32 %v873, %v941
      %v945 = vadd.f32 %v874, %v941
      %v946 = vadd.f32 %v875, %v941
      %v947 = vadd.f32 %v876, %v941
      %v948 = vadd.f32 %v877, %v941
      %v949 = vadd.f32 %v878, %v941
      %v950 = vadd.f32 %v879, %v941
      %v951 = vadd.f32 %v880, %v941
      %v952 = vadd.f32 %v881, %v941
      %v953 = vadd.f32 %v882, %v941
      %v954 = vadd.f32 %v883, %v941
      %v955 = vadd.f32 %v884, %v941
      %v956 = vadd.f32 %v885, %v941
      %v957 = vadd.f32 %v886, %v941
      %v958 = vadd.f32 %v887, %v941
      %v959 = vadd.f32 %v888, %v941
      %v960 = vadd.f32 %v889, %v941
      %v961 = vadd.f32 %v890, %v941
      %v962 = vadd.f32 %v891, %v941
      %v963 = vadd.f32 %v892, %v941
      %v964 = vadd.f32 %v893, %v941
      %v965 = vadd.f32 %v894, %v941
      %v966 = vadd.f32 %v895, %v941
      %v967 = vadd.f32 %v896, %v941
      %v968 = vadd.f32 %v897, %v941
      %v969 = vadd.f32 %v898, %v941
      %v970 = vadd.f32 %v899, %v941
      %v971 = vadd.f32 %v900, %v941
      %v972 = vadd.f32 %v901, %v941
      %v973 = vadd.f32 %v902, %v941
      %v974 = vadd.f32 %v903, %v941
      %v975 = vadd.f32 %v904, %v941
      %v976 = vadd.f32 %v905, %v941
      %v977 = vadd.f32 %v906, %v941
      %v978 = vadd.f32 %v907, %v941
      %v979 = vadd.f32 %v908, %v941
      %v980 = vadd.f32 %v909, %v941
      %v981 = vadd.f32 %v910, %v941
      %v982 = vadd.f32 %v911, %v941
      %v983 = vadd.f32 %v912, %v941
      %v984 = vadd.f32 %v913, %v941
      %v985 = vadd.f32 %v914, %v941
      %v986 = vadd.f32 %v915, %v941
      %v987 = vadd.f32 %v916, %v941
      %v988 = vadd.f32 %v917, %v941
      %v989 = vadd.f32 %v918, %v941
      %v990 = vadd.f32 %v919, %v941
      %v991 = vadd.f32 %v920, %v941
      %v992 = vadd.f32 %v921, %v941
      %v993 = vadd.f32 %v922, %v941
      %v994 = vadd.f32 %v923, %v941
      %v995 = vadd.f32 %v924, %v941
      %v996 = vadd.f32 %v925, %v941
      %v997 = vadd.f32 %v926, %v941
      %v998 = vadd.f32 %v927, %v941
      %v999 = vadd.f32 %v928, %v941
      %v1000 = vadd.f32 %v929, %v941
      %v1001 = vadd.f32 %v930, %v941
      %v1002 = vadd.f32 %v931, %v941
      %v1003 = vadd.f32 %v932, %v941
      %v1004 = vadd.f32 %v933, %v941
      %v1005 = vadd.f32 %v934, %v941
      %v1006 = vadd.f32 %v935, %v941
      %v1007 = vmax.f32 %v943, 0.0
      %v1008 = vmax.f32 %v944, 0.0
      %v1009 = vmax.f32 %v945, 0.0
      %v1010 = vmax.f32 %v946, 0.0
      %v1011 = vmax.f32 %v947, 0.0
      %v1012 = vmax.f32 %v948, 0.0
      %v1013 = vmax.f32 %v949, 0.0
      %v1014 = vmax.f32 %v950, 0.0
      %v1015 = vmax.f32 %v951, 0.0
      %v1016 = vmax.f32 %v952, 0.0
      %v1017 = vmax.f32 %v953, 0.0
      %v1018 = vmax.f32 %v954, 0.0
      %v1019 = vmax.f32 %v955, 0.0
      %v1020 = vmax.f32 %v956, 0.0
      %v1021 = vmax.f32 %v957, 0.0
      %v1022 = vmax.f32 %v958, 0.0
      %v1023 = vmax.f32 %v959, 0.0
      %v1024 = vmax.f32 %v960, 0.0
      %v1025 = vmax.f32 %v961, 0.0
      %v1026 = vmax.f32 %v962, 0.0
      %v1027 = vmax.f32 %v963, 0.0
      %v1028 = vmax.f32 %v964, 0.0
      %v1029 = vmax.f32 %v965, 0.0
      %v1030 = vmax.f32 %v966, 0.0
      %v1031 = vmax.f32 %v967, 0.0
      %v1032 = vmax.f32 %v968, 0.0
      %v1033 = vmax.f32 %v969, 0.0
      %v1034 = vmax.f32 %v970, 0.0
      %v1035 = vmax.f32 %v971, 0.0
      %v1036 = vmax.f32 %v972, 0.0
      %v1037 = vmax.f32 %v973, 0.0
      %v1038 = vmax.f32 %v974, 0.0
      %v1039 = vmax.f32 %v975, 0.0
      %v1040 = vmax.f32 %v976, 0.0
      %v1041 = vmax.f32 %v977, 0.0
      %v1042 = vmax.f32 %v978, 0.0
      %v1043 = vmax.f32 %v979, 0.0
      %v1044 = vmax.f32 %v980, 0.0
      %v1045 = vmax.f32 %v981, 0.0
      %v1046 = vmax.f32 %v982, 0.0
      %v1047 = vmax.f32 %v983, 0.0
      %v1048 = vmax.f32 %v984, 0.0
      %v1049 = vmax.f32 %v985, 0.0
      %v1050 = vmax.f32 %v986, 0.0
      %v1051 = vmax.f32 %v987, 0.0
      %v1052 = vmax.f32 %v988, 0.0
      %v1053 = vmax.f32 %v989, 0.0
      %v1054 = vmax.f32 %v990, 0.0
      %v1055 = vmax.f32 %v991, 0.0
      %v1056 = vmax.f32 %v992, 0.0
      %v1057 = vmax.f32 %v993, 0.0
      %v1058 = vmax.f32 %v994, 0.0
      %v1059 = vmax.f32 %v995, 0.0
      %v1060 = vmax.f32 %v996, 0.0
      %v1061 = vmax.f32 %v997, 0.0
      %v1062 = vmax.f32 %v998, 0.0
      %v1063 = vmax.f32 %v999, 0.0
      %v1064 = vmax.f32 %v1000, 0.0
      %v1065 = vmax.f32 %v1001, 0.0
      %v1066 = vmax.f32 %v1002, 0.0
      %v1067 = vmax.f32 %v1003, 0.0
      %v1068 = vmax.f32 %v1004, 0.0
      %v1069 = vmax.f32 %v1005, 0.0
      %v1070 = vmax.f32 %v1006, 0.0
      %1071 = vst [vmem:[#allocation10] sm:$0xff] %v1007
      %1072 = vst [vmem:[#allocation10 + $0x8] sm:$0xff] %v1008
      %1073 = vst [vmem:[#allocation10 + $0x10] sm:$0xff] %v1009
      %1074 = vst [vmem:[#allocation10 + $0x18] sm:$0xff] %v1010
      %1075 = vst [vmem:[#allocation10 + $0x20] sm:$0xff] %v1011
      %1076 = vst [vmem:[#allocation10 + $0x28] sm:$0xff] %v1012
      %1077 = vst [vmem:[#allocation10 + $0x30] sm:$0xff] %v1013
      %1078 = vst [vmem:[#allocation10 + $0x38] sm:$0xff] %v1014
      %1079 = vst [vmem:[#allocation10 + $0x40] sm:$0xff] %v1015
      %1080 = vst [vmem:[#allocation10 + $0x48] sm:$0xff] %v1016
      %1081 = vst [vmem:[#allocation10 + $0x50] sm:$0xff] %v1017
      %1082 = vst [vmem:[#allocation10 + $0x58] sm:$0xff] %v1018
      %1083 = vst [vmem:[#allocation10 + $0x60] sm:$0xff] %v1019
      %1084 = vst [vmem:[#allocation10 + $0x68] sm:$0xff] %v1020
      %1085 = vst [vmem:[#allocation10 + $0x70] sm:$0xff] %v1021
      %1086 = vst [vmem:[#allocation10 + $0x78] sm:$0xff] %v1022
      %1087 = vst [vmem:[#allocation10 + $0x80] sm:$0xff] %v1023
      %1088 = vst [vmem:[#allocation10 + $0x88] sm:$0xff] %v1024
      %1089 = vst [vmem:[#allocation10 + $0x90] sm:$0xff] %v1025
      %1090 = vst [vmem:[#allocation10 + $0x98] sm:$0xff] %v1026
      %1091 = vst [vmem:[#allocation10 + $0xa0] sm:$0xff] %v1027
      %1092 = vst [vmem:[#allocation10 + $0xa8] sm:$0xff] %v1028
      %1093 = vst [vmem:[#allocation10 + $0xb0] sm:$0xff] %v1029
      %1094 = vst [vmem:[#allocation10 + $0xb8] sm:$0xff] %v1030
      %1095 = vst [vmem:[#allocation10 + $0xc0] sm:$0xff] %v1031
      %1096 = vst [vmem:[#allocation10 + $0xc8] sm:$0xff] %v1032
      %1097 = vst [vmem:[#allocation10 + $0xd0] sm:$0xff] %v1033
      %1098 = vst [vmem:[#allocation10 + $0xd8] sm:$0xff] %v1034
      %1099 = vst [vmem:[#allocation10 + $0xe0] sm:$0xff] %v1035
      %1100 = vst [vmem:[#allocation10 + $0xe8] sm:$0xff] %v1036
      %1101 = vst [vmem:[#allocation10 + $0xf0] sm:$0xff] %v1037
      %1102 = vst [vmem:[#allocation10 + $0xf8] sm:$0xff] %v1038
      %1103 = vst [vmem:[#allocation10 + $0x100] sm:$0xff] %v1039
      %1104 = vst [vmem:[#allocation10 + $0x108] sm:$0xff] %v1040
      %1105 = vst [vmem:[#allocation10 + $0x110] sm:$0xff] %v1041
      %1106 = vst [vmem:[#allocation10 + $0x118] sm:$0xff] %v1042
      %1107 = vst [vmem:[#allocation10 + $0x120] sm:$0xff] %v1043
      %1108 = vst [vmem:[#allocation10 + $0x128] sm:$0xff] %v1044
      %1109 = vst [vmem:[#allocation10 + $0x130] sm:$0xff] %v1045
      %1110 = vst [vmem:[#allocation10 + $0x138] sm:$0xff] %v1046
      %1111 = vst [vmem:[#allocation10 + $0x140] sm:$0xff] %v1047
      %1112 = vst [vmem:[#allocation10 + $0x148] sm:$0xff] %v1048
      %1113 = vst [vmem:[#allocation10 + $0x150] sm:$0xff] %v1049
      %1114 = vst [vmem:[#allocation10 + $0x158] sm:$0xff] %v1050
      %1115 = vst [vmem:[#allocation10 + $0x160] sm:$0xff] %v1051
      %1116 = vst [vmem:[#allocation10 + $0x168] sm:$0xff] %v1052
      %1117 = vst [vmem:[#allocation10 + $0x170] sm:$0xff] %v1053
      %1118 = vst [vmem:[#allocation10 + $0x178] sm:$0xff] %v1054
      %1119 = vst [vmem:[#allocation10 + $0x180] sm:$0xff] %v1055
      %1120 = vst [vmem:[#allocation10 + $0x188] sm:$0xff] %v1056
      %1121 = vst [vmem:[#allocation10 + $0x190] sm:$0xff] %v1057
      %1122 = vst [vmem:[#allocation10 + $0x198] sm:$0xff] %v1058
      %1123 = vst [vmem:[#allocation10 + $0x1a0] sm:$0xff] %v1059
      %1124 = vst [vmem:[#allocation10 + $0x1a8] sm:$0xff] %v1060
      %1125 = vst [vmem:[#allocation10 + $0x1b0] sm:$0xff] %v1061
      %1126 = vst [vmem:[#allocation10 + $0x1b8] sm:$0xff] %v1062
      %1127 = vst [vmem:[#allocation10 + $0x1c0] sm:$0xff] %v1063
      %1128 = vst [vmem:[#allocation10 + $0x1c8] sm:$0xff] %v1064
      %1129 = vst [vmem:[#allocation10 + $0x1d0] sm:$0xff] %v1065
      %1130 = vst [vmem:[#allocation10 + $0x1d8] sm:$0xff] %v1066
      %1131 = vst [vmem:[#allocation10 + $0x1e0] sm:$0xff] %v1067
      %1132 = vst [vmem:[#allocation10 + $0x1e8] sm:$0xff] %v1068
      %1133 = vst [vmem:[#allocation10 + $0x1f0] sm:$0xff] %v1069
      %1134 = vst [vmem:[#allocation10 + $0x1f8] sm:$0xff] %v1070
    $region45: #{tpu_custom_call.1} parent=1 // pred_fallthru
      _
    // Predicated region
    $region46: #{tpu_custom_call.1} parent=1 // pred_check
      _
    $region47: #{tpu_custom_call.1} parent=1 // pred_check_branch
      %1136 = sbr.rel (0) target = $region49
    $region48: #{tpu_custom_call.1} parent=1 // pred_region
      %s1138 = ssub.s32 8192, 8192
      %1139 = vsyncadd [#allocation4], %s1138
      %s1140 = sshll.u32 [#allocation10], 4
      %s1141 = int_to_ptr.vmem [resolvable:$true] %s1140
      %1146 = dma.vmem_to_hbm [thread:$0]  %s1141, 8192, %s4, [#allocation4], 128, 128, 8
    $region49: #{tpu_custom_call.1} parent=1 // pred_fallthru
      _
    // Predicated region
    $region50: #{tpu_custom_call.1} parent=1 // pred_check
      _
    $region51: #{tpu_custom_call.1} parent=1 // pred_check_branch
      %1148 = sbr.rel (0) target = $region53
    $region52: #{tpu_custom_call.1} parent=1 // pred_region
      %1149 = dma.done [#allocation4], 8192
    $region53: #{tpu_custom_call.1} parent=1 // pred_fallthru
      _
    %1150 = vsyncpa [#allocation3], 1
    %1151 = vsyncpa [#allocation6], 1
    %1152 = vsyncpa [#allocation9], 1
    %1153 = vsyncpa [#allocation4], 1

</llo_original>
